<compile_context>
chip_gen: v5e
topology: v5e:2x2
jax: 0.10.0
libtpu: 0.0.40
codegen_flags: <defaults>
</compile_context>

<pallas_src>
import jax
import jax.numpy as jnp
from jax.experimental import pallas as pl
from jax.experimental.pallas import tpu as pltpu

BN_EPS = 1e-5
LANE = 128
_RESIDENT_WL_BUDGET = 8 << 20  # keep hidden stack VMEM-resident below 8 MiB


def _round_up(n, m):
    return ((n + m - 1) // m) * m


def _nbytes(a):
    return a.size * a.dtype.itemsize


def _vmem_limit(byte_estimate):
    # generous headroom, clamped to v7x physical VMEM
    return int(min(max(byte_estimate + (2 << 20), 4 << 20), 64 << 20))


# --------------------------- shared compute -----------------------------------

def _bn_relu(y, gamma, beta):
    """Training-mode BatchNorm1d (biased variance, one-pass stats) + ReLU.

    y: (B, Hp) f32, gamma/beta: (1, Hp) f32.  Affine folded into one FMA.
    Padded lanes (gamma == 0, y == 0) stay exactly 0.
    """
    mean = jnp.mean(y, axis=0, keepdims=True)
    var = jnp.mean(y * y, axis=0, keepdims=True) - mean * mean
    scale = gamma * jax.lax.rsqrt(var + BN_EPS)
    shift = beta - mean * scale
    return jnp.maximum(y * scale + shift, 0.0)


# ------------------------------ kernels ----------------------------------------

def _resident_kernel(x_ref, w1_ref, bn1_ref, wl_ref, bnl_ref, w2_ref, b2_ref,
                     o_ref):
    """Whole network in one grid step; hidden stack is VMEM-resident."""
    num_hidden = wl_ref.shape[0]

    # fc1 -> bn1 -> relu (Linear bias dropped: exactly cancelled by BatchNorm)
    y = jnp.dot(x_ref[...], w1_ref[...], preferred_element_type=jnp.float32)
    h = _bn_relu(y, bn1_ref[0:1, :], bn1_ref[1:2, :]).astype(jnp.bfloat16)

    def layer(l, h):
        y = jnp.dot(h, wl_ref[l], preferred_element_type=jnp.float32)
        bn = bnl_ref[l]
        return _bn_relu(y, bn[0:1, :], bn[1:2, :]).astype(jnp.bfloat16)

    h = jax.lax.fori_loop(0, num_hidden, layer, h, unroll=True)

    # fc2: output width 1 -> VPU lane reduction (no (B,1) MXU matmul)
    o_ref[...] = (
        jnp.sum(h.astype(jnp.float32) * w2_ref[...].astype(jnp.float32),
                axis=-1, keepdims=True)
        + b2_ref[...]
    )


def _streamed_kernel(x_ref, w1_ref, bn1_ref, wl_ref, bnl_ref, w2_ref, b2_ref,
                     o_ref, h_ref):
    """grid=(L,): one hidden weight block streamed per step, activation in VMEM."""
    l = pl.program_id(0)
    last = pl.num_programs(0) - 1

    @pl.when(l == 0)
    def _():
        y = jnp.dot(x_ref[...], w1_ref[...], preferred_element_type=jnp.float32)
        h_ref[...] = _bn_relu(y, bn1_ref[0:1, :], bn1_ref[1:2, :]).astype(h_ref.dtype)

    y = jnp.dot(h_ref[...], wl_ref[...], preferred_element_type=jnp.float32)
    h_new = _bn_relu(y, bnl_ref[0:1, :], bnl_ref[1:2, :])

    @pl.when(l != last)
    def _():
        h_ref[...] = h_new.astype(h_ref.dtype)   # skip dead store on last step

    @pl.when(l == last)
    def _():
        o_ref[...] = (
            jnp.sum(h_new * w2_ref[...].astype(jnp.float32), axis=-1, keepdims=True)
            + b2_ref[...]
        )


# ---------------------------- pallas wrappers -----------------------------------

def _const_spec(shape):
    n = len(shape)
    return pl.BlockSpec(tuple(shape), lambda l, _n=n: (0,) * _n)


def _stacked_spec(shape):
    # (L, ...) stacked params: squeeze the layer axis, index by grid step l.
    n = len(shape)
    return pl.BlockSpec((None,) + tuple(shape[1:]),
                        lambda l, _n=n: (l,) + (0,) * (_n - 1))


def _forward_resident(x, params):
    B = x.shape[0]
    x = x.astype(jnp.bfloat16)
    args = (x, params["w1"], params["bn1"], params["wl"], params["bnl"],
            params["w2"], params["b2"])
    vmem = _vmem_limit(2 * sum(_nbytes(a) for a in args) + 4 * B)
    return pl.pallas_call(
        _resident_kernel,
        out_shape=jax.ShapeDtypeStruct((B, 1), jnp.float32),
        grid=(1,),
        in_specs=[_const_spec(a.shape) for a in args],
        out_specs=_const_spec((B, 1)),
        compiler_params=pltpu.CompilerParams(
            dimension_semantics=("arbitrary",), vmem_limit_bytes=vmem),
    )(*args)


def _forward_streamed(x, params):
    B = x.shape[0]
    L, Hp, _ = params["wl"].shape
    x = x.astype(jnp.bfloat16)
    args = (x, params["w1"], params["bn1"], params["wl"], params["bnl"],
            params["w2"], params["b2"])
    per_step = 2 * (_nbytes(params["wl"]) // L + _nbytes(params["bnl"]) // L)
    resident = sum(_nbytes(a) for a in (x, params["w1"], params["bn1"],
                                        params["w2"], params["b2"]))
    vmem = _vmem_limit(per_step + 2 * resident + B * Hp * 2 + 4 * B)
    return pl.pallas_call(
        _streamed_kernel,
        out_shape=jax.ShapeDtypeStruct((B, 1), jnp.float32),
        grid=(L,),
        in_specs=[
            _const_spec(x.shape),
            _const_spec(params["w1"].shape),
            _const_spec(params["bn1"].shape),
            _stacked_spec(params["wl"].shape),
            _stacked_spec(params["bnl"].shape),
            _const_spec(params["w2"].shape),
            _const_spec(params["b2"].shape),
        ],
        out_specs=_const_spec((B, 1)),
        scratch_shapes=[pltpu.VMEM((B, Hp), jnp.bfloat16)],
        compiler_params=pltpu.CompilerParams(
            dimension_semantics=("arbitrary",), vmem_limit_bytes=vmem),
    )(*args)


def neural_network_forward(x, params):
    """Fused forward pass of the PyTorch `NeuralNetwork` module."""
    if _nbytes(params["wl"]) <= _RESIDENT_WL_BUDGET:
        return _forward_resident(x, params)
    return _forward_streamed(x, params)


# ------------------------------ params ------------------------------------------

def init_params(key, input_size, hidden_size, num_layers):
    """PyTorch-style Linear init (uniform +/- 1/sqrt(fan_in)); BN gamma=1, beta=0.

    Hidden width is zero-padded to a multiple of 128 lanes; padded columns use
    weight=0 / gamma=0 / beta=0 so they stay exactly zero through the stack.
    Weights are stored in bf16 (MXU path); BN params / fc2 bias stay f32.
    Linear biases b1/bl are created only for the pure-JAX reference — they are
    exactly cancelled by the following training-mode BatchNorm, so the kernel
    never loads them.
    """
    assert num_layers >= 1
    H, Hp = hidden_size, _round_up(hidden_size, LANE)

    def u(key, shape, fan_in):
        bound = 1.0 / float(fan_in) ** 0.5
        return jax.random.uniform(key, shape, jnp.float32, -bound, bound)

    keys = jax.random.split(key, 2 * num_layers + 4)
    p = {}

    # fc1
    w1 = jnp.zeros((input_size, Hp), jnp.float32)
    w1 = w1.at[:, :H].set(u(keys[0], (input_size, H), input_size))
    p["w1"] = w1.astype(jnp.bfloat16)
    p["b1"] = jnp.zeros((1, Hp), jnp.float32).at[:, :H].set(
        u(keys[1], (1, H), input_size))                       # reference only
    p["bn1"] = jnp.zeros((2, Hp), jnp.float32).at[0, :H].set(1.0)   # [gamma; beta]

    # hidden stack
    wl = jnp.zeros((num_layers, Hp, Hp), jnp.float32)
    bl = jnp.zeros((num_layers, 1, Hp), jnp.float32)          # reference only
    bnl = jnp.zeros((num_layers, 2, Hp), jnp.float32)
    for li in range(num_layers):
        wl = wl.at[li, :H, :H].set(u(keys[2 + 2 * li], (H, H), H))
        bl = bl.at[li, :, :H].set(u(keys[3 + 2 * li], (1, H), H))
        bnl = bnl.at[li, 0, :H].set(1.0)
    p["wl"] = wl.astype(jnp.bfloat16)
    p["bl"] = bl
    p["bnl"] = bnl

    # fc2: (H, 1) stored as a (1, Hp) row vector for the lane reduction
    w2 = jnp.zeros((1, Hp), jnp.float32)
    w2 = w2.at[:, :H].set(u(keys[-2], (H, 1), H).reshape(1, H))
    p["w2"] = w2.astype(jnp.bfloat16)
    p["b2"] = u(keys[-1], (1, 1), H)
    return p


# pure-JAX reference — literal PyTorch math (incl. the BN-cancelled Linear biases)
def reference_forward(x, params):
    f32 = jnp.float32

    def bn_relu(y, g, beta):
        mean = jnp.mean(y, axis=0, keepdims=True)
        var = jnp.mean((y - mean) ** 2, axis=0, keepdims=True)
        return jnp.maximum((y - mean) / jnp.sqrt(var + BN_EPS) * g + beta, 0.0)

    h = x.astype(f32) @ params["w1"].astype(f32) + params["b1"]
    h = bn_relu(h, params["bn1"][0:1], params["bn1"][1:2])
    for li in range(params["wl"].shape[0]):
        y = h @ params["wl"][li].astype(f32) + params["bl"][li]
        h = bn_relu(y, params["bnl"][li, 0:1], params["bnl"][li, 1:2])
    return jnp.sum(h * params["w2"].astype(f32), axis=-1, keepdims=True) + params["b2"]


if __name__ == "__main__":
    batch, input_size, hidden_size, num_layers = 8, 16, 32, 2

    key = jax.random.PRNGKey(0)
    kx, kp = jax.random.split(key)
    x = jax.random.normal(kx, (batch, input_size), jnp.float32)
    params = init_params(kp, input_size, hidden_size, num_layers)

    ref = reference_forward(x, params)

    # default path for this config: resident (whole stack in VMEM, no layer grid)
    out = jax.block_until_ready(neural_network_forward(x, params))
    assert out.shape == (batch, 1), out.shape
    assert jnp.allclose(out, ref, atol=6e-2, rtol=6e-2), (out, ref)

    # also exercise the streamed (large-Hp) path on the same small problem
    out_s = jax.block_until_ready(_forward_streamed(x, params))
    assert out_s.shape == (batch, 1), out_s.shape
    assert jnp.allclose(out_s, ref, atol=6e-2, rtol=6e-2), (out_s, ref)

    print("KERNEL_OK")
</pallas_src>

<mosaic_0001>
module attributes {stable_mosaic.version = 11 : i64} {
  func.func @_resident_kernel(%arg0: i32, %arg1: memref<8x16xbf16, #tpu.memory_space<vmem>>, %arg2: memref<16x128xbf16, #tpu.memory_space<vmem>>, %arg3: memref<2x128xf32, #tpu.memory_space<vmem>>, %arg4: memref<2x128x128xbf16, #tpu.memory_space<vmem>>, %arg5: memref<2x2x128xf32, #tpu.memory_space<vmem>>, %arg6: memref<1x128xbf16, #tpu.memory_space<vmem>>, %arg7: memref<1x1xf32, #tpu.memory_space<vmem>>, %arg8: memref<8x1xf32, #tpu.memory_space<vmem>>) attributes {dimension_semantics = [#tpu.dimension_semantics<arbitrary>], iteration_bounds = array<i64: 1>, scalar_prefetch = 0 : i64, scratch_operands = 0 : i64, tpu.core_type = #tpu.core_type<tc>, window_params = [{pipeline_mode = #tpu.pipeline_mode<synchronous>, transform_indices = @transform_0, window_bounds = array<i64: 8, 16>}, {pipeline_mode = #tpu.pipeline_mode<synchronous>, transform_indices = @transform_1, window_bounds = array<i64: 16, 128>}, {pipeline_mode = #tpu.pipeline_mode<synchronous>, transform_indices = @transform_2, window_bounds = array<i64: 2, 128>}, {pipeline_mode = #tpu.pipeline_mode<synchronous>, transform_indices = @transform_3, window_bounds = array<i64: 2, 128, 128>}, {pipeline_mode = #tpu.pipeline_mode<synchronous>, transform_indices = @transform_4, window_bounds = array<i64: 2, 2, 128>}, {pipeline_mode = #tpu.pipeline_mode<synchronous>, transform_indices = @transform_5, window_bounds = array<i64: 1, 128>}, {pipeline_mode = #tpu.pipeline_mode<synchronous>, transform_indices = @transform_6, window_bounds = array<i64: 1, 1>}, {pipeline_mode = #tpu.pipeline_mode<synchronous>, transform_indices = @transform_7, window_bounds = array<i64: 8, 1>}]} {
    %c0 = arith.constant 0 : index
    %c0_0 = arith.constant 0 : index
    %0 = vector.load %arg1[%c0, %c0_0] : memref<8x16xbf16, #tpu.memory_space<vmem>>, vector<8x16xbf16>
    %c0_1 = arith.constant 0 : index
    %c0_2 = arith.constant 0 : index
    %1 = vector.load %arg2[%c0_1, %c0_2] : memref<16x128xbf16, #tpu.memory_space<vmem>>, vector<16x128xbf16>
    %cst = arith.constant dense<0.000000e+00> : vector<8x128xf32>
    %2 = tpu.matmul %0, %1, %cst {dimension_numbers = #tpu.dot_dimension_numbers<[1], [0], [0], [1], [0, 0, 1, 1], [], []>} : vector<8x16xbf16>, vector<16x128xbf16>, vector<8x128xf32> -> vector<8x128xf32>
    %c0_3 = arith.constant 0 : index
    %c0_4 = arith.constant 0 : index
    %3 = vector.load %arg3[%c0_3, %c0_4] : memref<2x128xf32, #tpu.memory_space<vmem>>, vector<1x128xf32>
    %c1 = arith.constant 1 : index
    %c0_5 = arith.constant 0 : index
    %4 = vector.load %arg3[%c1, %c0_5] : memref<2x128xf32, #tpu.memory_space<vmem>>, vector<1x128xf32>
    %cst_6 = arith.constant dense<0.000000e+00> : vector<128xf32>
    %5 = vector.multi_reduction <add>, %2, %cst_6 [0] : vector<8x128xf32> to vector<128xf32>
    %6 = vector.shape_cast %5 : vector<128xf32> to vector<1x128xf32>
    %cst_7 = arith.constant 8.000000e+00 : f32
    %7 = vector.broadcast %cst_7 : f32 to vector<1x128xf32>
    %8 = arith.divf %6, %7 : vector<1x128xf32>
    %9 = arith.mulf %2, %2 : vector<8x128xf32>
    %cst_8 = arith.constant dense<0.000000e+00> : vector<128xf32>
    %10 = vector.multi_reduction <add>, %9, %cst_8 [0] : vector<8x128xf32> to vector<128xf32>
    %11 = vector.shape_cast %10 : vector<128xf32> to vector<1x128xf32>
    %cst_9 = arith.constant 8.000000e+00 : f32
    %12 = vector.broadcast %cst_9 : f32 to vector<1x128xf32>
    %13 = arith.divf %11, %12 : vector<1x128xf32>
    %14 = arith.mulf %8, %8 : vector<1x128xf32>
    %15 = arith.subf %13, %14 : vector<1x128xf32>
    %cst_10 = arith.constant 9.99999974E-6 : f32
    %16 = vector.broadcast %cst_10 : f32 to vector<1x128xf32>
    %17 = arith.addf %15, %16 : vector<1x128xf32>
    %18 = math.rsqrt %17 : vector<1x128xf32>
    %19 = arith.mulf %3, %18 : vector<1x128xf32>
    %20 = arith.mulf %8, %19 : vector<1x128xf32>
    %21 = arith.subf %4, %20 : vector<1x128xf32>
    %22 = vector.broadcast %19 : vector<1x128xf32> to vector<8x128xf32>
    %23 = arith.mulf %2, %22 : vector<8x128xf32>
    %24 = vector.broadcast %21 : vector<1x128xf32> to vector<8x128xf32>
    %25 = arith.addf %23, %24 : vector<8x128xf32>
    %cst_11 = arith.constant 0.000000e+00 : f32
    %26 = vector.broadcast %cst_11 : f32 to vector<8x128xf32>
    %27 = arith.maximumf %25, %26 : vector<8x128xf32>
    %28 = arith.truncf %27 : vector<8x128xf32> to vector<8x128xbf16>
    %c0_i32 = arith.constant 0 : i32
    %29 = arith.index_cast %c0_i32 : i32 to index
    %c0_12 = arith.constant 0 : index
    %c0_13 = arith.constant 0 : index
    %30 = vector.load %arg4[%29, %c0_12, %c0_13] : memref<2x128x128xbf16, #tpu.memory_space<vmem>>, vector<1x128x128xbf16>
    %31 = vector.shape_cast %30 : vector<1x128x128xbf16> to vector<128x128xbf16>
    %cst_14 = arith.constant dense<0.000000e+00> : vector<8x128xf32>
    %32 = tpu.matmul %28, %31, %cst_14 {dimension_numbers = #tpu.dot_dimension_numbers<[1], [0], [0], [1], [0, 0, 1, 1], [], []>} : vector<8x128xbf16>, vector<128x128xbf16>, vector<8x128xf32> -> vector<8x128xf32>
    %33 = arith.index_cast %c0_i32 : i32 to index
    %c0_15 = arith.constant 0 : index
    %c0_16 = arith.constant 0 : index
    %34 = vector.load %arg5[%33, %c0_15, %c0_16] : memref<2x2x128xf32, #tpu.memory_space<vmem>>, vector<1x2x128xf32>
    %35 = vector.shape_cast %34 : vector<1x2x128xf32> to vector<2x128xf32>
    %36 = vector.extract_strided_slice %35 {offsets = [0, 0], sizes = [1, 128], strides = [1, 1]} : vector<2x128xf32> to vector<1x128xf32>
    %37 = vector.extract_strided_slice %35 {offsets = [1, 0], sizes = [1, 128], strides = [1, 1]} : vector<2x128xf32> to vector<1x128xf32>
    %cst_17 = arith.constant dense<0.000000e+00> : vector<128xf32>
    %38 = vector.multi_reduction <add>, %32, %cst_17 [0] : vector<8x128xf32> to vector<128xf32>
    %39 = vector.shape_cast %38 : vector<128xf32> to vector<1x128xf32>
    %cst_18 = arith.constant 8.000000e+00 : f32
    %40 = vector.broadcast %cst_18 : f32 to vector<1x128xf32>
    %41 = arith.divf %39, %40 : vector<1x128xf32>
    %42 = arith.mulf %32, %32 : vector<8x128xf32>
    %cst_19 = arith.constant dense<0.000000e+00> : vector<128xf32>
    %43 = vector.multi_reduction <add>, %42, %cst_19 [0] : vector<8x128xf32> to vector<128xf32>
    %44 = vector.shape_cast %43 : vector<128xf32> to vector<1x128xf32>
    %cst_20 = arith.constant 8.000000e+00 : f32
    %45 = vector.broadcast %cst_20 : f32 to vector<1x128xf32>
    %46 = arith.divf %44, %45 : vector<1x128xf32>
    %47 = arith.mulf %41, %41 : vector<1x128xf32>
    %48 = arith.subf %46, %47 : vector<1x128xf32>
    %cst_21 = arith.constant 9.99999974E-6 : f32
    %49 = vector.broadcast %cst_21 : f32 to vector<1x128xf32>
    %50 = arith.addf %48, %49 : vector<1x128xf32>
    %51 = math.rsqrt %50 : vector<1x128xf32>
    %52 = arith.mulf %36, %51 : vector<1x128xf32>
    %53 = arith.mulf %41, %52 : vector<1x128xf32>
    %54 = arith.subf %37, %53 : vector<1x128xf32>
    %55 = vector.broadcast %52 : vector<1x128xf32> to vector<8x128xf32>
    %56 = arith.mulf %32, %55 : vector<8x128xf32>
    %57 = vector.broadcast %54 : vector<1x128xf32> to vector<8x128xf32>
    %58 = arith.addf %56, %57 : vector<8x128xf32>
    %cst_22 = arith.constant 0.000000e+00 : f32
    %59 = vector.broadcast %cst_22 : f32 to vector<8x128xf32>
    %60 = arith.maximumf %58, %59 : vector<8x128xf32>
    %61 = arith.truncf %60 : vector<8x128xf32> to vector<8x128xbf16>
    %c1_i32 = arith.constant 1 : i32
    %62 = arith.index_cast %c1_i32 : i32 to index
    %c0_23 = arith.constant 0 : index
    %c0_24 = arith.constant 0 : index
    %63 = vector.load %arg4[%62, %c0_23, %c0_24] : memref<2x128x128xbf16, #tpu.memory_space<vmem>>, vector<1x128x128xbf16>
    %64 = vector.shape_cast %63 : vector<1x128x128xbf16> to vector<128x128xbf16>
    %cst_25 = arith.constant dense<0.000000e+00> : vector<8x128xf32>
    %65 = tpu.matmul %61, %64, %cst_25 {dimension_numbers = #tpu.dot_dimension_numbers<[1], [0], [0], [1], [0, 0, 1, 1], [], []>} : vector<8x128xbf16>, vector<128x128xbf16>, vector<8x128xf32> -> vector<8x128xf32>
    %66 = arith.index_cast %c1_i32 : i32 to index
    %c0_26 = arith.constant 0 : index
    %c0_27 = arith.constant 0 : index
    %67 = vector.load %arg5[%66, %c0_26, %c0_27] : memref<2x2x128xf32, #tpu.memory_space<vmem>>, vector<1x2x128xf32>
    %68 = vector.shape_cast %67 : vector<1x2x128xf32> to vector<2x128xf32>
    %69 = vector.extract_strided_slice %68 {offsets = [0, 0], sizes = [1, 128], strides = [1, 1]} : vector<2x128xf32> to vector<1x128xf32>
    %70 = vector.extract_strided_slice %68 {offsets = [1, 0], sizes = [1, 128], strides = [1, 1]} : vector<2x128xf32> to vector<1x128xf32>
    %cst_28 = arith.constant dense<0.000000e+00> : vector<128xf32>
    %71 = vector.multi_reduction <add>, %65, %cst_28 [0] : vector<8x128xf32> to vector<128xf32>
    %72 = vector.shape_cast %71 : vector<128xf32> to vector<1x128xf32>
    %cst_29 = arith.constant 8.000000e+00 : f32
    %73 = vector.broadcast %cst_29 : f32 to vector<1x128xf32>
    %74 = arith.divf %72, %73 : vector<1x128xf32>
    %75 = arith.mulf %65, %65 : vector<8x128xf32>
    %cst_30 = arith.constant dense<0.000000e+00> : vector<128xf32>
    %76 = vector.multi_reduction <add>, %75, %cst_30 [0] : vector<8x128xf32> to vector<128xf32>
    %77 = vector.shape_cast %76 : vector<128xf32> to vector<1x128xf32>
    %cst_31 = arith.constant 8.000000e+00 : f32
    %78 = vector.broadcast %cst_31 : f32 to vector<1x128xf32>
    %79 = arith.divf %77, %78 : vector<1x128xf32>
    %80 = arith.mulf %74, %74 : vector<1x128xf32>
    %81 = arith.subf %79, %80 : vector<1x128xf32>
    %cst_32 = arith.constant 9.99999974E-6 : f32
    %82 = vector.broadcast %cst_32 : f32 to vector<1x128xf32>
    %83 = arith.addf %81, %82 : vector<1x128xf32>
    %84 = math.rsqrt %83 : vector<1x128xf32>
    %85 = arith.mulf %69, %84 : vector<1x128xf32>
    %86 = arith.mulf %74, %85 : vector<1x128xf32>
    %87 = arith.subf %70, %86 : vector<1x128xf32>
    %88 = vector.broadcast %85 : vector<1x128xf32> to vector<8x128xf32>
    %89 = arith.mulf %65, %88 : vector<8x128xf32>
    %90 = vector.broadcast %87 : vector<1x128xf32> to vector<8x128xf32>
    %91 = arith.addf %89, %90 : vector<8x128xf32>
    %cst_33 = arith.constant 0.000000e+00 : f32
    %92 = vector.broadcast %cst_33 : f32 to vector<8x128xf32>
    %93 = arith.maximumf %91, %92 : vector<8x128xf32>
    %94 = arith.truncf %93 : vector<8x128xf32> to vector<8x128xbf16>
    %c2_i32 = arith.constant 2 : i32
    %95 = arith.extf %94 : vector<8x128xbf16> to vector<8x128xf32>
    %c0_34 = arith.constant 0 : index
    %c0_35 = arith.constant 0 : index
    %96 = vector.load %arg6[%c0_34, %c0_35] : memref<1x128xbf16, #tpu.memory_space<vmem>>, vector<1x128xbf16>
    %97 = arith.extf %96 : vector<1x128xbf16> to vector<1x128xf32>
    %98 = vector.broadcast %97 : vector<1x128xf32> to vector<8x128xf32>
    %99 = arith.mulf %95, %98 : vector<8x128xf32>
    %cst_36 = arith.constant dense<0.000000e+00> : vector<8xf32>
    %100 = vector.multi_reduction <add>, %99, %cst_36 [1] : vector<8x128xf32> to vector<8xf32>
    %101 = vector.shape_cast %100 : vector<8xf32> to vector<8x1xf32>
    %c0_37 = arith.constant 0 : index
    %c0_38 = arith.constant 0 : index
    %102 = vector.load %arg7[%c0_37, %c0_38] : memref<1x1xf32, #tpu.memory_space<vmem>>, vector<1x1xf32>
    %103 = vector.broadcast %102 : vector<1x1xf32> to vector<8x1xf32>
    %104 = arith.addf %101, %103 : vector<8x1xf32>
    %c0_39 = arith.constant 0 : index
    %c0_40 = arith.constant 0 : index
    %105 = vector.load %arg8[%c0_39, %c0_40] : memref<8x1xf32, #tpu.memory_space<vmem>>, vector<8x1xf32>
    tpu.vector_store %arg8[%c0_39, %c0_40], %104 {strides = array<i32>} : memref<8x1xf32, #tpu.memory_space<vmem>>, vector<8x1xf32>,
    return
  }
  func.func @transform_0(%arg0: i32) -> (i32, i32) {
    %c0_i32 = arith.constant 0 : i32
    %c0_i32_0 = arith.constant 0 : i32
    %c0_i32_1 = arith.constant 0 : i32
    return %c0_i32, %c0_i32_0 : i32, i32
  }
  func.func @transform_1(%arg0: i32) -> (i32, i32) {
    %c0_i32 = arith.constant 0 : i32
    %c0_i32_0 = arith.constant 0 : i32
    %c0_i32_1 = arith.constant 0 : i32
    return %c0_i32, %c0_i32_0 : i32, i32
  }
  func.func @transform_2(%arg0: i32) -> (i32, i32) {
    %c0_i32 = arith.constant 0 : i32
    %c0_i32_0 = arith.constant 0 : i32
    %c0_i32_1 = arith.constant 0 : i32
    return %c0_i32, %c0_i32_0 : i32, i32
  }
  func.func @transform_3(%arg0: i32) -> (i32, i32, i32) {
    %c0_i32 = arith.constant 0 : i32
    %c0_i32_0 = arith.constant 0 : i32
    %c0_i32_1 = arith.constant 0 : i32
    %c0_i32_2 = arith.constant 0 : i32
    return %c0_i32, %c0_i32_0, %c0_i32_1 : i32, i32, i32
  }
  func.func @transform_4(%arg0: i32) -> (i32, i32, i32) {
    %c0_i32 = arith.constant 0 : i32
    %c0_i32_0 = arith.constant 0 : i32
    %c0_i32_1 = arith.constant 0 : i32
    %c0_i32_2 = arith.constant 0 : i32
    return %c0_i32, %c0_i32_0, %c0_i32_1 : i32, i32, i32
  }
  func.func @transform_5(%arg0: i32) -> (i32, i32) {
    %c0_i32 = arith.constant 0 : i32
    %c0_i32_0 = arith.constant 0 : i32
    %c0_i32_1 = arith.constant 0 : i32
    return %c0_i32, %c0_i32_0 : i32, i32
  }
  func.func @transform_6(%arg0: i32) -> (i32, i32) {
    %c0_i32 = arith.constant 0 : i32
    %c0_i32_0 = arith.constant 0 : i32
    %c0_i32_1 = arith.constant 0 : i32
    return %c0_i32, %c0_i32_0 : i32, i32
  }
  func.func @transform_7(%arg0: i32) -> (i32, i32) {
    %c0_i32 = arith.constant 0 : i32
    %c0_i32_0 = arith.constant 0 : i32
    %c0_i32_1 = arith.constant 0 : i32
    return %c0_i32, %c0_i32_0 : i32, i32
  }
}

</mosaic_0001>

<llo_original>
// kernel: tpu_custom_call.1
$region0: #{tpu_custom_call.1}
  #allocation0 [shape = 'u32[]', space=smem, size = 0x4, offset = 0x4, fixed_abs, tag = 'smem constant byte address 0x4 - core index']
  #allocation1 [shape = 'u32[72,128]{1,0:T(1,128)}', space=vmem, size = 0x9000, scoped, tag = 'internal scratch']
  #allocation2 [shape = 'f32[1,1]{1,0:T(1,128)S(1)}', space=vmem, size = 0x200, scoped, tag = 'scoped memory for tpu_custom_call.1']
  %s0 = inlined_call_operand.hbm [shape: bf16[8,16], index: 0, kind: input, shape index: {}]
  %s1 = inlined_call_operand.hbm [shape: bf16[16,128], index: 1, kind: input, shape index: {}]
  %s2 = inlined_call_operand.hbm [shape: f32[2,128], index: 2, kind: input, shape index: {}]
  %s3 = inlined_call_operand.hbm [shape: bf16[2,128,128], index: 3, kind: input, shape index: {}]
  %s4 = inlined_call_operand.vmem [shape: f32[2,2,128], index: 4, kind: input, shape index: {}]
  %s5 = inlined_call_operand.vmem [shape: bf16[1,128], index: 5, kind: input, shape index: {}]
  %s6 = inlined_call_operand.<no memory space> [shape: f32[1,1], index: 6, kind: input, shape index: {}]
  %s7 = inlined_call_operand.vmem [shape: f32[8,1], index: 7, kind: output, shape index: {}]
  %s8 = sld [smem:[#allocation0]]
  $region54: #{tpu_custom_call.1} parent=0
    _
  %s10 = ssub.s32 1, %s8
  %s11 = scalar_select 0, %s10, %s8
  %v12 = vstv %s6
  %13 = vst [vmem:[#allocation2] sm:$0x1] %v12
  $region1: #{tpu_custom_call.1} parent=0
    #allocation3 [shape = 'u8[2048]{0}', space=vmem, size = 0x800, scoped, tag = 'input window, operand 0, single buffered']
    #allocation4 [shape = 's32[1]{0}', space=sflag, size = 0x4, scoped, tag = 'scoped memory for tpu_custom_call.1']
    #allocation5 [shape = 'u8[4096]{0}', space=vmem, size = 0x1000, scoped, tag = 'input window, operand 1, single buffered']
    #allocation6 [shape = 's32[1]{0}', space=sflag, size = 0x4, scoped, tag = 'scoped memory for tpu_custom_call.1']
    #allocation7 [shape = 'u8[1024]{0}', space=vmem, size = 0x400, scoped, tag = 'input window, operand 2, single buffered']
    #allocation8 [shape = 'u8[65536]{0}', space=vmem, size = 0x10000, scoped, tag = 'input window, operand 3, single buffered']
    #allocation9 [shape = 's32[1]{0}', space=sflag, size = 0x4, scoped, tag = 'scoped memory for tpu_custom_call.1']
    %14 = vsyncpa [#allocation4], 0
    %15 = vsyncpa [#allocation6], 0
    %16 = vsyncpa [#allocation9], 0
    // Predicated region
    $region2: #{tpu_custom_call.1} parent=1 // pred_check
      _
    $region3: #{tpu_custom_call.1} parent=1 // pred_check_branch
      %18 = sbr.rel (0) target = $region5
    $region4: #{tpu_custom_call.1} parent=1 // pred_region
      %20 = vsyncadd [#allocation4], 0
      %s22 = sshll.u32 %s0, 4
      %s23 = int_to_ptr.hbm [resolvable:$true] %s22
      %s24 = sshll.u32 [#allocation3], 4
      %s25 = int_to_ptr.vmem [resolvable:$true] %s24
      %27 = dma.hbm_to_vmem [thread:$0]  %s23, 64, %s25, [#allocation4]
    $region5: #{tpu_custom_call.1} parent=1 // pred_fallthru
      _
    // Predicated region
    $region6: #{tpu_custom_call.1} parent=1 // pred_check
      _
    $region7: #{tpu_custom_call.1} parent=1 // pred_check_branch
      %29 = sbr.rel (0) target = $region9
    $region8: #{tpu_custom_call.1} parent=1 // pred_region
      %31 = vsyncadd [#allocation6], 0
      %s32 = sshll.u32 %s1, 4
      %s33 = int_to_ptr.hbm [resolvable:$true] %s32
      %s34 = sshll.u32 [#allocation5], 4
      %s35 = int_to_ptr.vmem [resolvable:$true] %s34
      %40 = dma.hbm_to_vmem [thread:$0]  %s33, 128, %s35, [#allocation6], 64, 64, 4
    $region9: #{tpu_custom_call.1} parent=1 // pred_fallthru
      _
    // Predicated region
    $region10: #{tpu_custom_call.1} parent=1 // pred_check
      _
    $region11: #{tpu_custom_call.1} parent=1 // pred_check_branch
      %42 = sbr.rel (0) target = $region13
    $region12: #{tpu_custom_call.1} parent=1 // pred_region
      %44 = vsyncadd [#allocation6], 0
      %s46 = sshll.u32 %s2, 4
      %s47 = int_to_ptr.hbm [resolvable:$true] %s46
      %s48 = sshll.u32 [#allocation7], 4
      %s49 = int_to_ptr.vmem [resolvable:$true] %s48
      %51 = dma.hbm_to_vmem [thread:$0]  %s47, 32, %s49, [#allocation6]
    $region13: #{tpu_custom_call.1} parent=1 // pred_fallthru
      _
    // Predicated region
    $region14: #{tpu_custom_call.1} parent=1 // pred_check
      _
    $region15: #{tpu_custom_call.1} parent=1 // pred_check_branch
      %53 = sbr.rel (0) target = $region17
    $region16: #{tpu_custom_call.1} parent=1 // pred_region
      %55 = vsyncadd [#allocation9], 0
      %s56 = sshll.u32 %s3, 4
      %s57 = int_to_ptr.hbm [resolvable:$true] %s56
      %s58 = sshll.u32 [#allocation8], 4
      %s59 = int_to_ptr.vmem [resolvable:$true] %s58
      %64 = dma.hbm_to_vmem [thread:$0]  %s57, 2048, %s59, [#allocation9], 64, 64, 4
    $region17: #{tpu_custom_call.1} parent=1 // pred_fallthru
      _
    // Predicated region
    $region18: #{tpu_custom_call.1} parent=1 // pred_check
      _
    $region19: #{tpu_custom_call.1} parent=1 // pred_check_branch
      %66 = sbr.rel (0) target = $region21
    $region20: #{tpu_custom_call.1} parent=1 // pred_region
      _
    $region21: #{tpu_custom_call.1} parent=1 // pred_fallthru
      _
    // Predicated region
    $region22: #{tpu_custom_call.1} parent=1 // pred_check
      _
    $region23: #{tpu_custom_call.1} parent=1 // pred_check_branch
      %68 = sbr.rel (0) target = $region25
    $region24: #{tpu_custom_call.1} parent=1 // pred_region
      _
    $region25: #{tpu_custom_call.1} parent=1 // pred_fallthru
      _
    // Predicated region
    $region26: #{tpu_custom_call.1} parent=1 // pred_check
      _
    $region27: #{tpu_custom_call.1} parent=1 // pred_check_branch
      %70 = sbr.rel (0) target = $region29
    $region28: #{tpu_custom_call.1} parent=1 // pred_region
      _
    $region29: #{tpu_custom_call.1} parent=1 // pred_fallthru
      _
    // Predicated region
    $region30: #{tpu_custom_call.1} parent=1 // pred_check
      _
    $region31: #{tpu_custom_call.1} parent=1 // pred_check_branch
      %72 = sbr.rel (0) target = $region33
    $region32: #{tpu_custom_call.1} parent=1 // pred_region
      %74 = dma.done [#allocation4], 64
    $region33: #{tpu_custom_call.1} parent=1 // pred_fallthru
      _
    // Predicated region
    $region34: #{tpu_custom_call.1} parent=1 // pred_check
      _
    $region35: #{tpu_custom_call.1} parent=1 // pred_check_branch
      %76 = sbr.rel (0) target = $region37
    $region36: #{tpu_custom_call.1} parent=1 // pred_region
      %78 = dma.done [#allocation6], 128
    $region37: #{tpu_custom_call.1} parent=1 // pred_fallthru
      _
    // Predicated region
    $region38: #{tpu_custom_call.1} parent=1 // pred_check
      _
    $region39: #{tpu_custom_call.1} parent=1 // pred_check_branch
      %80 = sbr.rel (0) target = $region41
    $region40: #{tpu_custom_call.1} parent=1 // pred_region
      %82 = dma.done [#allocation6], 32
    $region41: #{tpu_custom_call.1} parent=1 // pred_fallthru
      _
    // Predicated region
    $region42: #{tpu_custom_call.1} parent=1 // pred_check
      _
    $region43: #{tpu_custom_call.1} parent=1 // pred_check_branch
      %84 = sbr.rel (0) target = $region45
    $region44: #{tpu_custom_call.1} parent=1 // pred_region
      %86 = dma.done [#allocation9], 2048
    $region45: #{tpu_custom_call.1} parent=1 // pred_fallthru
      _
    %v88 = vld [vmem:[#allocation3] sm:$0xf]
    %v89 = vld [vmem:[#allocation5] sm:$0xf]
    %v90 = vld [vmem:[#allocation5 + $0x4] sm:$0xf]
    %v93 = vunpack.c.l.b16 %v89
    %v94 = vunpack.c.l.b16 %v90
    %v95 = vpack.c.b16 %v94, %v93
    %vm97 = vcmask 130048
    %v99 = vsel %vm97, %v88, 0
    %101 = vmatpush.bf16.msra.mxu0 0
    %102 = vmatpush.bf16.msra.mxu0 0
    %103 = vmatpush.bf16.msra.mxu0 0
    %104 = vmatpush.bf16.msra.mxu0 0
    %105 = vmatpush.bf16.msra.mxu0 0
    %106 = vmatpush.bf16.msra.mxu0 0
    %107 = vmatpush.bf16.msra.mxu0 0
    %108 = vmatpush.bf16.msra.mxu0 %v95
    %109 = vmatmul.bf16.gmra.mxu0 %v99
    %v110 = vpop.f32.mrf.mxu0
    %v111 = vadd.f32 0.0, %v110
    %v112 = vpop.f32.mrf.mxu0
    %113 = vdwg.mxu0
    %v114 = vld [vmem:[#allocation7] sm:$0x1]
    %v115 = vld [vmem:[#allocation7 + $0x1] sm:$0x1]
    %v116 = vrot.slane %v111, 4
    %v117 = vadd.f32 %v111, %v116
    %v118 = vrot.slane %v117, 2
    %v119 = vadd.f32 %v117, %v118
    %v120 = vrot.slane %v119, 1
    %v121 = vadd.f32 %v119, %v120
    %v122 = vrcp.pop 8.0
    %v123 = vmul.f32 8.0, %v122
    %v124 = vsub.f32 1.0, %v123
    %v125 = vmul.f32 %v122, %v124
    %v126 = vadd.f32 %v122, %v125
    %vm127 = vweird.f32 %v122
    %v128 = vsel %vm127, %v122, %v126
    %v129 = vmul.f32 %v121, %v128
    %v130 = vmul.f32 %v111, %v111
    %v131 = vrot.slane %v130, 4
    %v132 = vadd.f32 %v130, %v131
    %v133 = vrot.slane %v132, 2
    %v134 = vadd.f32 %v132, %v133
    %v135 = vrot.slane %v134, 1
    %v136 = vadd.f32 %v134, %v135
    %v137 = vmul.f32 %v136, %v128
    %v138 = vmul.f32 %v129, %v129
    %v139 = vsub.f32 %v137, %v138
    %v140 = vadd.f32 %v139, 1e-05
    %v141 = vrsqrt.pop %v140
    %v142 = vmul.f32 %v141, %v140
    %v143 = vmul.f32 %v142, %v141
    %v144 = vmul.f32 0.5, %v143
    %v145 = vsub.f32 1.5, %v144
    %v146 = vmul.f32 %v141, %v145
    %vm147 = vweird.f32 %v140
    %vm148 = vweird.f32 %v141
    %vm149 = vmor %vm147, %vm148
    %v150 = vsel %vm149, %v141, %v146
    %v151 = vmul.f32 %v114, %v150
    %v152 = vmul.f32 %v129, %v151
    %v153 = vsub.f32 %v115, %v152
    %v154 = vperm.slane %v151, 0
    %v155 = vmul.f32 %v111, %v154
    %v156 = vperm.slane %v153, 0
    %v157 = vadd.f32 %v155, %v156
    %v158 = vmax.f32 %v157, 0.0
    %v159 = vpack.c.bf16 %v158, %v158
    %v160 = vld [vmem:[#allocation8] sm:$0xf]
    %v161 = vld [vmem:[#allocation8 + $0x4] sm:$0xf]
    %v162 = vld [vmem:[#allocation8 + $0x8] sm:$0xf]
    %v163 = vld [vmem:[#allocation8 + $0xc] sm:$0xf]
    %v164 = vld [vmem:[#allocation8 + $0x10] sm:$0xf]
    %v165 = vld [vmem:[#allocation8 + $0x14] sm:$0xf]
    %v166 = vld [vmem:[#allocation8 + $0x18] sm:$0xf]
    %v167 = vld [vmem:[#allocation8 + $0x1c] sm:$0xf]
    %v168 = vld [vmem:[#allocation8 + $0x20] sm:$0xf]
    %v169 = vld [vmem:[#allocation8 + $0x24] sm:$0xf]
    %v170 = vld [vmem:[#allocation8 + $0x28] sm:$0xf]
    %v171 = vld [vmem:[#allocation8 + $0x2c] sm:$0xf]
    %v172 = vld [vmem:[#allocation8 + $0x30] sm:$0xf]
    %v173 = vld [vmem:[#allocation8 + $0x34] sm:$0xf]
    %v174 = vld [vmem:[#allocation8 + $0x38] sm:$0xf]
    %v175 = vld [vmem:[#allocation8 + $0x3c] sm:$0xf]
    %v192 = vunpack.c.l.b16 %v160
    %v193 = vunpack.c.l.b16 %v161
    %v194 = vunpack.c.l.b16 %v162
    %v195 = vunpack.c.l.b16 %v163
    %v196 = vunpack.c.l.b16 %v164
    %v197 = vunpack.c.l.b16 %v165
    %v198 = vunpack.c.l.b16 %v166
    %v199 = vunpack.c.l.b16 %v167
    %v200 = vunpack.c.l.b16 %v168
    %v201 = vunpack.c.l.b16 %v169
    %v202 = vunpack.c.l.b16 %v170
    %v203 = vunpack.c.l.b16 %v171
    %v204 = vunpack.c.l.b16 %v172
    %v205 = vunpack.c.l.b16 %v173
    %v206 = vunpack.c.l.b16 %v174
    %v207 = vunpack.c.l.b16 %v175
    %v208 = vpack.c.b16 %v193, %v192
    %v209 = vpack.c.b16 %v195, %v194
    %v210 = vpack.c.b16 %v197, %v196
    %v211 = vpack.c.b16 %v199, %v198
    %v212 = vpack.c.b16 %v201, %v200
    %v213 = vpack.c.b16 %v203, %v202
    %v214 = vpack.c.b16 %v205, %v204
    %v215 = vpack.c.b16 %v207, %v206
    %224 = vmatpush.bf16.msra.mxu0 %v215
    %225 = vmatpush.bf16.msra.mxu0 %v214
    %226 = vmatpush.bf16.msra.mxu0 %v213
    %227 = vmatpush.bf16.msra.mxu0 %v212
    %228 = vmatpush.bf16.msra.mxu0 %v211
    %229 = vmatpush.bf16.msra.mxu0 %v210
    %230 = vmatpush.bf16.msra.mxu0 %v209
    %231 = vmatpush.bf16.msra.mxu0 %v208
    %232 = vmatmul.bf16.gmra.mxu0 %v159
    %v233 = vpop.f32.mrf.mxu0
    %v234 = vadd.f32 0.0, %v233
    %v235 = vpop.f32.mrf.mxu0
    %236 = vdwg.mxu0
    %v237 = vld [vmem:[%s4] sm:$0x3]
    %v238 = vrot.slane %v234, 4
    %v239 = vadd.f32 %v234, %v238
    %v240 = vrot.slane %v239, 2
    %v241 = vadd.f32 %v239, %v240
    %v242 = vrot.slane %v241, 1
    %v243 = vadd.f32 %v241, %v242
    %v244 = vmul.f32 %v243, %v128
    %v245 = vmul.f32 %v234, %v234
    %v246 = vrot.slane %v245, 4
    %v247 = vadd.f32 %v245, %v246
    %v248 = vrot.slane %v247, 2
    %v249 = vadd.f32 %v247, %v248
    %v250 = vrot.slane %v249, 1
    %v251 = vadd.f32 %v249, %v250
    %v252 = vmul.f32 %v251, %v128
    %v253 = vmul.f32 %v244, %v244
    %v254 = vsub.f32 %v252, %v253
    %v255 = vadd.f32 %v254, 1e-05
    %v256 = vrsqrt.pop %v255
    %v257 = vmul.f32 %v256, %v255
    %v258 = vmul.f32 %v257, %v256
    %v259 = vmul.f32 0.5, %v258
    %v260 = vsub.f32 1.5, %v259
    %v261 = vmul.f32 %v256, %v260
    %vm262 = vweird.f32 %v255
    %vm263 = vweird.f32 %v256
    %vm264 = vmor %vm262, %vm263
    %v265 = vsel %vm264, %v256, %v261
    %v266 = vmul.f32 %v237, %v265
    %v267 = vmul.f32 %v244, %v266
    %v269 = vrot.slane %v267, 7
    %v271 = vsub.f32 %v237, %v269
    %v272 = vperm.slane %v266, 0
    %v273 = vmul.f32 %v234, %v272
    %v274 = vperm.slane %v271, 1
    %v275 = vadd.f32 %v273, %v274
    %v276 = vmax.f32 %v275, 0.0
    %v277 = vpack.c.bf16 %v276, %v276
    %s278 = scalar_lea.vmem [#allocation8], 64
    %v279 = vld [vmem:[%s278] sm:$0xf]
    %v280 = vld [vmem:[%s278 + $0x4] sm:$0xf]
    %v281 = vld [vmem:[%s278 + $0x8] sm:$0xf]
    %v282 = vld [vmem:[%s278 + $0xc] sm:$0xf]
    %v283 = vld [vmem:[%s278 + $0x10] sm:$0xf]
    %v284 = vld [vmem:[%s278 + $0x14] sm:$0xf]
    %v285 = vld [vmem:[%s278 + $0x18] sm:$0xf]
    %v286 = vld [vmem:[%s278 + $0x1c] sm:$0xf]
    %v287 = vld [vmem:[%s278 + $0x20] sm:$0xf]
    %v288 = vld [vmem:[%s278 + $0x24] sm:$0xf]
    %v289 = vld [vmem:[%s278 + $0x28] sm:$0xf]
    %v290 = vld [vmem:[%s278 + $0x2c] sm:$0xf]
    %v291 = vld [vmem:[%s278 + $0x30] sm:$0xf]
    %v292 = vld [vmem:[%s278 + $0x34] sm:$0xf]
    %v293 = vld [vmem:[%s278 + $0x38] sm:$0xf]
    %v294 = vld [vmem:[%s278 + $0x3c] sm:$0xf]
    %v311 = vunpack.c.l.b16 %v279
    %v312 = vunpack.c.l.b16 %v280
    %v313 = vunpack.c.l.b16 %v281
    %v314 = vunpack.c.l.b16 %v282
    %v315 = vunpack.c.l.b16 %v283
    %v316 = vunpack.c.l.b16 %v284
    %v317 = vunpack.c.l.b16 %v285
    %v318 = vunpack.c.l.b16 %v286
    %v319 = vunpack.c.l.b16 %v287
    %v320 = vunpack.c.l.b16 %v288
    %v321 = vunpack.c.l.b16 %v289
    %v322 = vunpack.c.l.b16 %v290
    %v323 = vunpack.c.l.b16 %v291
    %v324 = vunpack.c.l.b16 %v292
    %v325 = vunpack.c.l.b16 %v293
    %v326 = vunpack.c.l.b16 %v294
    %v327 = vpack.c.b16 %v312, %v311
    %v328 = vpack.c.b16 %v314, %v313
    %v329 = vpack.c.b16 %v316, %v315
    %v330 = vpack.c.b16 %v318, %v317
    %v331 = vpack.c.b16 %v320, %v319
    %v332 = vpack.c.b16 %v322, %v321
    %v333 = vpack.c.b16 %v324, %v323
    %v334 = vpack.c.b16 %v326, %v325
    %343 = vmatpush.bf16.msra.mxu0 %v334
    %344 = vmatpush.bf16.msra.mxu0 %v333
    %345 = vmatpush.bf16.msra.mxu0 %v332
    %346 = vmatpush.bf16.msra.mxu0 %v331
    %347 = vmatpush.bf16.msra.mxu0 %v330
    %348 = vmatpush.bf16.msra.mxu0 %v329
    %349 = vmatpush.bf16.msra.mxu0 %v328
    %350 = vmatpush.bf16.msra.mxu0 %v327
    %351 = vmatmul.bf16.gmra.mxu0 %v277
    %v352 = vpop.f32.mrf.mxu0
    %v353 = vadd.f32 0.0, %v352
    %v354 = vpop.f32.mrf.mxu0
    %355 = vdwg.mxu0
    %s356 = scalar_lea.vmem %s4, 2
    %v357 = vld [vmem:[%s356] sm:$0x3]
    %v358 = vrot.slane %v353, 4
    %v359 = vadd.f32 %v353, %v358
    %v360 = vrot.slane %v359, 2
    %v361 = vadd.f32 %v359, %v360
    %v362 = vrot.slane %v361, 1
    %v363 = vadd.f32 %v361, %v362
    %v364 = vmul.f32 %v363, %v128
    %v365 = vmul.f32 %v353, %v353
    %v366 = vrot.slane %v365, 4
    %v367 = vadd.f32 %v365, %v366
    %v368 = vrot.slane %v367, 2
    %v369 = vadd.f32 %v367, %v368
    %v370 = vrot.slane %v369, 1
    %v371 = vadd.f32 %v369, %v370
    %v372 = vmul.f32 %v371, %v128
    %v373 = vmul.f32 %v364, %v364
    %v374 = vsub.f32 %v372, %v373
    %v375 = vadd.f32 %v374, 1e-05
    %v376 = vrsqrt.pop %v375
    %v377 = vmul.f32 %v376, %v375
    %v378 = vmul.f32 %v377, %v376
    %v379 = vmul.f32 0.5, %v378
    %v380 = vsub.f32 1.5, %v379
    %v381 = vmul.f32 %v376, %v380
    %vm382 = vweird.f32 %v375
    %vm383 = vweird.f32 %v376
    %vm384 = vmor %vm382, %vm383
    %v385 = vsel %vm384, %v376, %v381
    %v386 = vmul.f32 %v357, %v385
    %v387 = vmul.f32 %v364, %v386
    %v389 = vrot.slane %v387, 7
    %v391 = vsub.f32 %v357, %v389
    %v392 = vperm.slane %v386, 0
    %v393 = vmul.f32 %v353, %v392
    %v394 = vperm.slane %v391, 1
    %v395 = vadd.f32 %v393, %v394
    %v396 = vmax.f32 %v395, 0.0
    %v397 = vpack.c.bf16 %v396, %v396
    %v398 = vunpack.c.l.bf16 %v397
    %v399 = vld [vmem:[%s5] sm:$0x1]
    %v400 = vunpack.c.l.bf16 %v399
    %v401 = vperm.slane %v400, 0
    %v402 = vmul.f32 %v398, %v401
    %403 = vadd.xlane.f32.xlu0 %v402
    %v404 = vpop.xlane.xlu0 %403
    %v405 = vld [vmem:[#allocation2] sm:$0x1]
    %v407 = vperm.slane %v405, 0
    %v409 = vadd.f32 %v404, %v407
    %vm410 = vcmask 7168
    %411 = vst.msk [vmem:[%s7] sm:$0xff] %vm410, %v409
    // Predicated region
    $region46: #{tpu_custom_call.1} parent=1 // pred_check
      _
    $region47: #{tpu_custom_call.1} parent=1 // pred_check_branch
      %413 = sbr.rel (0) target = $region49
    $region48: #{tpu_custom_call.1} parent=1 // pred_region
      _
    $region49: #{tpu_custom_call.1} parent=1 // pred_fallthru
      _
    // Predicated region
    $region50: #{tpu_custom_call.1} parent=1 // pred_check
      _
    $region51: #{tpu_custom_call.1} parent=1 // pred_check_branch
      %415 = sbr.rel (0) target = $region53
    $region52: #{tpu_custom_call.1} parent=1 // pred_region
      _
    $region53: #{tpu_custom_call.1} parent=1 // pred_fallthru
      _
    %416 = vsyncpa [#allocation4], 1
    %417 = vsyncpa [#allocation6], 1
    %418 = vsyncpa [#allocation9], 1

</llo_original>
